<compile_context>
chip_gen: v6e
topology: v6e:2x2x1
jax: 0.10.0
libtpu: 0.0.40
codegen_flags: <defaults>
</compile_context>

<pallas_src>
import functools

import jax
import jax.numpy as jnp
from jax.experimental import pallas as pl
from jax.experimental.pallas import tpu as pltpu


_VMEM_LIMIT_BYTES = 48 * 1024 * 1024   # explicit cap, safe on v7x (64 MiB VMEM)
_VMEM_TILE_BUDGET = 20 * 1024 * 1024   # working-set target used to size row tiles


def _round_up(x, m):
    return (x + m - 1) // m * m


def _pick_row_tile(n_rows, vmem_bytes_per_row, max_row_tile):
    """Largest multiple-of-8 row tile whose double-buffered VMEM working set
    fits the budget; tiny inputs collapse to a single (ragged) block."""
    t = _VMEM_TILE_BUDGET // max(int(vmem_bytes_per_row), 1)
    t = min(t, int(max_row_tile), _round_up(max(n_rows, 1), 8))
    t = max(8, (t // 8) * 8)
    return int(t)


# ----------------------------------------------------------------------------
# Pass 1: per-batch feature sums (global average pooling numerator).
# ----------------------------------------------------------------------------
def _pool_sums_kernel(vf_ref, bidx_ref, part_ref, *, n_rows, n_half, row_tile,
                      n_batches):
    core = pl.program_id(0)            # TensorCore split ("parallel")
    step = pl.program_id(1)            # row tiles        ("arbitrary" reduction)

    @pl.when(step == 0)
    def _():
        part_ref[...] = jnp.zeros_like(part_ref)

    tile = core * n_half + step                         # logical tile id
    vf = vf_ref[...]                                    # (T, C), native dtype

    # Mask rows past the end of the voxel array: the ragged last tile and the
    # fully-out-of-range tiles from the core split (their block index is
    # clamped in the index_map, so re-read data must not be double counted).
    # The select also keeps garbage/NaN from the unwritten part of a ragged
    # block out of the MXU accumulator.
    row_ids = tile * row_tile + jax.lax.broadcasted_iota(
        jnp.int32, (row_tile, 1), 0)
    vf = jnp.where(row_ids < n_rows, vf, jnp.zeros_like(vf))

    bidx = bidx_ref[...].reshape(1, row_tile)           # lane-dense indices
    onehot = (bidx == jax.lax.broadcasted_iota(
        jnp.int32, (n_batches, row_tile), 0)).astype(vf.dtype)      # (B, T)

    # One native (B, T) @ (T, C) MXU contraction over the big row axis per
    # tile, f32 accumulation into the resident output block.
    part_ref[...] += jax.lax.dot_general(
        onehot, vf, (((1,), (0,)), ((), ())),
        preferred_element_type=jnp.float32)[None, :, :]


# ----------------------------------------------------------------------------
# Pass 2: out = voxel_feat * scaling[batch_idx]  (gather via one-hot matmul).
# ----------------------------------------------------------------------------
def _apply_scaling_kernel(vf_ref, code_ref, smat_ref, out_ref):
    codes = code_ref[...]                                        # (T, K) int32
    onehot = (codes == jax.lax.broadcasted_iota(
        jnp.int32, codes.shape, 1)).astype(jnp.float32)          # (T, K)
    # Gather each row's scaling vector with the (idle) MXU: K = fold*B is tiny
    # and the (block-diagonal) scaling table is VMEM resident.
    scale = jax.lax.dot_general(
        onehot, smat_ref[...], (((1,), (0,)), ((), ())),
        preferred_element_type=jnp.float32)                      # (T, fold*C)
    out_ref[...] = (vf_ref[...].astype(jnp.float32) * scale).astype(out_ref.dtype)
    # Ragged-tail rows of the last block compute garbage but their writes are
    # dropped automatically (partial output block).


def minkowski_se(voxel_feat, batch_idx, global_feat, global_weight, params,
                 *, max_row_tile=8192, num_core_splits=2):
    """Forward pass of MinkowskiSE. Returns (modulated features, scaling)."""
    n_voxels, channels = voxel_feat.shape
    n_batches = global_feat.shape[0]
    feat_bytes = jnp.dtype(voxel_feat.dtype).itemsize
    batch_idx = batch_idx.astype(jnp.int32)
    f32 = jnp.float32
    hi = jax.lax.Precision.HIGHEST

    # -------------------- pass 1: per-batch feature sums --------------------
    lane_c = _round_up(channels, 128)                 # VMEM lane padding of C
    t1 = _pick_row_tile(n_voxels, 2 * lane_c * feat_bytes + 64, max_row_tile)
    n_tiles = pl.cdiv(n_voxels, t1)
    n_splits = num_core_splits if n_tiles > 1 else 1
    n_half = pl.cdiv(n_tiles, n_splits)

    # Lane-dense batch indices: (n_tiles, 1, T) int32 with (1, 1, T) blocks.
    # Only the tiny index vector is padded -- the feature tensor is NOT.
    bidx_lane = jnp.pad(batch_idx, (0, n_tiles * t1 - n_voxels),
                        constant_values=n_batches).reshape(n_tiles, 1, t1)

    def _tile_idx(core, step):
        # Clamp fully-out-of-range split tiles; they are masked in-kernel.
        return jnp.minimum(core * n_half + step, n_tiles - 1)

    partial_sums = pl.pallas_call(
        functools.partial(_pool_sums_kernel, n_rows=n_voxels, n_half=n_half,
                          row_tile=t1, n_batches=n_batches),
        grid_spec=pltpu.PrefetchScalarGridSpec(
            num_scalar_prefetch=0,
            grid=(n_splits, n_half),
            in_specs=[
                pl.BlockSpec((t1, channels), lambda c, i: (_tile_idx(c, i), 0)),
                pl.BlockSpec((1, 1, t1), lambda c, i: (_tile_idx(c, i), 0, 0)),
            ],
            out_specs=pl.BlockSpec((1, n_batches, channels),
                                   lambda c, i: (c, 0, 0)),
        ),
        out_shape=jax.ShapeDtypeStruct((n_splits, n_batches, channels), f32),
        compiler_params=pltpu.CompilerParams(
            dimension_semantics=("parallel", "arbitrary"),
            vmem_limit_bytes=_VMEM_LIMIT_BYTES),
    )(voxel_feat, bidx_lane)

    # ------- squeeze-excite MLP on tiny (B, .) tensors (plain XLA) ----------
    sums = partial_sums.sum(axis=0)                                   # (B, C)
    counts = jnp.zeros((n_batches,), f32).at[batch_idx].add(1.0)
    pooled = sums / jnp.maximum(counts, 1.0)[:, None]                 # avg pool
    gt = (jnp.dot(global_feat.astype(f32), params["w_glob"].T.astype(f32),
                  precision=hi) + params["b_glob"].astype(f32))
    gt = jnp.asarray(global_weight, f32) * gt
    combined = jnp.concatenate([pooled, gt], axis=1)                  # (B, 2C)
    hidden = jax.nn.gelu(
        jnp.dot(combined, params["w1"].T.astype(f32), precision=hi)
        + params["b1"].astype(f32), approximate=False)                # exact GELU
    scaling = jax.nn.sigmoid(
        jnp.dot(hidden, params["w2"].T.astype(f32), precision=hi)
        + params["b2"].astype(f32))                                   # (B, C)

    # ------------- pass 2: out = voxel_feat * scaling[batch_idx] ------------
    # Fold rows so the last dim is a full 128 lanes when possible (free
    # row-major reshape): lane-dense loads/stores, unmasked vst, 4x less VMEM.
    if channels < 128 and 128 % channels == 0 and \
            n_voxels % (128 // channels) == 0:
        fold = 128 // channels
    else:
        fold = 1  # TODO(synk): pad a partial tail row to keep the fold for any Nv
    n_rows2 = n_voxels // fold
    width = fold * channels
    vf2 = voxel_feat.reshape(n_rows2, width)

    # Per folded row, `fold` gather codes (code = slot*B + batch index),
    # repeated B times so the one-hot is a plain compare against a lane iota.
    codes = (batch_idx.reshape(n_rows2, fold)
             + jnp.arange(fold, dtype=jnp.int32)[None, :] * n_batches)
    codes = jnp.repeat(codes, n_batches, axis=1)                 # (rows2, fold*B)
    # Block-diagonal scaling table -> folded gather is a single matmul.
    smat = jnp.kron(jnp.eye(fold, dtype=f32), scaling.astype(f32))

    k_dim = fold * n_batches
    row_bytes2 = (4 * _round_up(width, 128) * feat_bytes          # in + out, x2 bufs
                  + 2 * _round_up(k_dim, 128) * 4)                # codes, x2 bufs
    t2 = _pick_row_tile(n_rows2, row_bytes2, max_row_tile)
    n_tiles2 = pl.cdiv(n_rows2, t2)

    out = pl.pallas_call(
        _apply_scaling_kernel,
        grid_spec=pltpu.PrefetchScalarGridSpec(
            num_scalar_prefetch=0,
            grid=(n_tiles2,),
            in_specs=[
                pl.BlockSpec((t2, width), lambda i: (i, 0)),
                pl.BlockSpec((t2, k_dim), lambda i: (i, 0)),
                pl.BlockSpec((k_dim, width), lambda i: (0, 0)),
            ],
            out_specs=pl.BlockSpec((t2, width), lambda i: (i, 0)),
        ),
        out_shape=jax.ShapeDtypeStruct((n_rows2, width), voxel_feat.dtype),
        compiler_params=pltpu.CompilerParams(
            dimension_semantics=("parallel",),
            vmem_limit_bytes=_VMEM_LIMIT_BYTES),
    )(vf2, codes, smat)

    return out.reshape(n_voxels, channels), scaling


# ----------------------------------------------------------------------------
# Pure-JAX reference (replica of the PyTorch MinkowskiSE forward).
# ----------------------------------------------------------------------------
def _reference(voxel_feat, batch_idx, global_feat, global_weight, params):
    n_batches = global_feat.shape[0]
    f32 = jnp.float32
    hi = jax.lax.Precision.HIGHEST
    sums = jax.ops.segment_sum(voxel_feat.astype(f32), batch_idx,
                               num_segments=n_batches)              # (B, C)
    counts = jax.ops.segment_sum(jnp.ones_like(batch_idx, dtype=f32),
                                 batch_idx, num_segments=n_batches)
    pooled = sums / jnp.maximum(counts, 1.0)[:, None]
    gt = jnp.dot(global_feat, params["w_glob"].T, precision=hi) + params["b_glob"]
    gt = global_weight * gt
    combined = jnp.concatenate([pooled, gt], axis=1)
    h = jax.nn.gelu(jnp.dot(combined, params["w1"].T, precision=hi)
                    + params["b1"], approximate=False)
    scaling = jax.nn.sigmoid(jnp.dot(h, params["w2"].T, precision=hi)
                             + params["b2"])
    return voxel_feat * scaling[batch_idx], scaling


def _make_case(key, n_voxels, n_batches, channels, glob_dim, reduction):
    hid = max(channels // reduction, 1)
    ks = jax.random.split(key, 9)
    voxel_feat = jax.random.normal(ks[0], (n_voxels, channels), jnp.float32)
    batch_idx = jax.random.randint(ks[1], (n_voxels,), 0, n_batches)
    global_feat = jax.random.normal(ks[2], (n_batches, glob_dim), jnp.float32)
    params = {
        "w_glob": 0.20 * jax.random.normal(ks[3], (channels, glob_dim), jnp.float32),
        "b_glob": 0.10 * jax.random.normal(ks[4], (channels,), jnp.float32),
        "w1":     0.20 * jax.random.normal(ks[5], (hid, 2 * channels), jnp.float32),
        "b1":     0.10 * jax.random.normal(ks[6], (hid,), jnp.float32),
        "w2":     0.20 * jax.random.normal(ks[7], (channels, hid), jnp.float32),
        "b2":     0.10 * jax.random.normal(ks[8], (channels,), jnp.float32),
    }
    return voxel_feat, batch_idx, global_feat, jnp.float32(0.7), params


if __name__ == "__main__":
    key = jax.random.PRNGKey(0)
    k1, k2 = jax.random.split(key)

    # Small tiles on purpose (max_row_tile=16) so the demo exercises multiple
    # grid steps, ragged tiles in both passes and the clamped overflow tiles
    # of the TensorCore split; production uses the default budgeted tiles.
    cases = [
        # (key, Nv, B, C, G, reduction, max_row_tile)
        (k1, 68, 2, 32, 16, 4, 16),   # folded lane-dense path (fold=4), ragged
        (k2, 50, 3, 32, 16, 4, 16),   # fallback (no fold), odd batch count
    ]
    for ck, nv, nb, ch, gd, red, tile in cases:
        vf, bidx, gf, gw, params = _make_case(ck, nv, nb, ch, gd, red)
        out, scaling = minkowski_se(vf, bidx, gf, gw, params, max_row_tile=tile)
        jax.block_until_ready((out, scaling))

        ref_out, ref_scaling = _reference(vf, bidx, gf, gw, params)
        assert out.shape == (nv, ch) and scaling.shape == (nb, ch)
        # Structural bugs (wrong gather / double counting / missing masks)
        # produce errors orders of magnitude above these tolerances.
        assert jnp.allclose(scaling, ref_scaling, atol=1e-3, rtol=1e-3), "scaling mismatch"
        assert jnp.allclose(out, ref_out, atol=1e-3, rtol=1e-3), "output mismatch"

    print("KERNEL_OK")
</pallas_src>

<mosaic_0001>
module attributes {stable_mosaic.version = 11 : i64} {
  func.func @_pool_sums_kernel(%arg0: i32, %arg1: i32, %arg2: memref<16x32xf32, #tpu.memory_space<vmem>>, %arg3: memref<1x1x16xi32, #tpu.memory_space<vmem>>, %arg4: memref<1x2x32xf32, #tpu.memory_space<vmem>>) attributes {dimension_semantics = [#tpu.dimension_semantics<parallel>, #tpu.dimension_semantics<arbitrary>], iteration_bounds = array<i64: 2, 3>, scalar_prefetch = 0 : i64, scratch_operands = 0 : i64, tpu.core_type = #tpu.core_type<tc>, window_params = [{transform_indices = @transform_0, window_bounds = array<i64: 16, 32>}, {transform_indices = @transform_1, window_bounds = array<i64: 1, 1, 16>}, {transform_indices = @transform_2, window_bounds = array<i64: 1, 2, 32>}]} {
    %c0_i32 = arith.constant 0 : i32
    %0 = arith.cmpi eq, %arg1, %c0_i32 : i32
    %1 = arith.extui %0 : i1 to i32
    %c0_i32_0 = arith.constant 0 : i32
    %2 = arith.cmpi ne, %1, %c0_i32_0 : i32
    scf.if %2 {
      %cst_12 = arith.constant 0.000000e+00 : f32
      %28 = vector.broadcast %cst_12 : f32 to vector<1x2x32xf32>
      %c0_13 = arith.constant 0 : index
      %c0_14 = arith.constant 0 : index
      %c0_15 = arith.constant 0 : index
      %29 = vector.load %arg4[%c0_13, %c0_14, %c0_15] : memref<1x2x32xf32, #tpu.memory_space<vmem>>, vector<1x2x32xf32>
      tpu.vector_store %arg4[%c0_13, %c0_14, %c0_15], %28 {strides = array<i32>} : memref<1x2x32xf32, #tpu.memory_space<vmem>>, vector<1x2x32xf32>,
    } else {
    }
    %c3_i32 = arith.constant 3 : i32
    %3 = arith.muli %arg0, %c3_i32 : i32
    %4 = arith.addi %3, %arg1 : i32
    %c0 = arith.constant 0 : index
    %c0_1 = arith.constant 0 : index
    %5 = vector.load %arg2[%c0, %c0_1] : memref<16x32xf32, #tpu.memory_space<vmem>>, vector<16x32xf32>
    %c16_i32 = arith.constant 16 : i32
    %6 = arith.muli %4, %c16_i32 : i32
    %7 = tpu.iota {dimensions = array<i32: 0>} : vector<16x1xi32>
    %8 = vector.broadcast %6 : i32 to vector<16x1xi32>
    %9 = arith.addi %8, %7 : vector<16x1xi32>
    %c68_i32 = arith.constant 68 : i32
    %10 = vector.broadcast %c68_i32 : i32 to vector<16x1xi32>
    %11 = arith.cmpi slt, %9, %10 : vector<16x1xi32>
    %cst = arith.constant 0.000000e+00 : f32
    %12 = vector.broadcast %cst : f32 to vector<16x32xf32>
    %13 = vector.shape_cast %11 : vector<16x1xi1> to vector<16x1xi1>
    %14 = vector.broadcast %13 : vector<16x1xi1> to vector<16x32xi1>
    %15 = arith.select %14, %5, %12 : vector<16x32xi1>, vector<16x32xf32>
    %c0_2 = arith.constant 0 : index
    %c0_3 = arith.constant 0 : index
    %c0_4 = arith.constant 0 : index
    %16 = vector.load %arg3[%c0_2, %c0_3, %c0_4] : memref<1x1x16xi32, #tpu.memory_space<vmem>>, vector<1x1x16xi32>
    %17 = vector.shape_cast %16 : vector<1x1x16xi32> to vector<1x16xi32>
    %18 = tpu.iota {dimensions = array<i32: 0>} : vector<2x16xi32>
    %19 = vector.broadcast %17 : vector<1x16xi32> to vector<2x16xi32>
    %20 = arith.cmpi eq, %19, %18 : vector<2x16xi32>
    %21 = arith.extui %20 : vector<2x16xi1> to vector<2x16xi32>
    %22 = arith.sitofp %21 : vector<2x16xi32> to vector<2x16xf32>
    %c0_5 = arith.constant 0 : index
    %c0_6 = arith.constant 0 : index
    %c0_7 = arith.constant 0 : index
    %23 = vector.load %arg4[%c0_5, %c0_6, %c0_7] : memref<1x2x32xf32, #tpu.memory_space<vmem>>, vector<1x2x32xf32>
    %cst_8 = arith.constant dense<0.000000e+00> : vector<2x32xf32>
    %24 = tpu.matmul %22, %15, %cst_8 {dimension_numbers = #tpu.dot_dimension_numbers<[1], [0], [0], [1], [0, 0, 1, 1], [], []>} : vector<2x16xf32>, vector<16x32xf32>, vector<2x32xf32> -> vector<2x32xf32>
    %25 = vector.shape_cast %24 : vector<2x32xf32> to vector<1x2x32xf32>
    %26 = arith.addf %23, %25 : vector<1x2x32xf32>
    %c0_9 = arith.constant 0 : index
    %c0_10 = arith.constant 0 : index
    %c0_11 = arith.constant 0 : index
    %27 = vector.load %arg4[%c0_9, %c0_10, %c0_11] : memref<1x2x32xf32, #tpu.memory_space<vmem>>, vector<1x2x32xf32>
    tpu.vector_store %arg4[%c0_9, %c0_10, %c0_11], %26 {strides = array<i32>} : memref<1x2x32xf32, #tpu.memory_space<vmem>>, vector<1x2x32xf32>,
    return
  }
  func.func @transform_0(%arg0: i32, %arg1: i32) -> (i32, i32) {
    %c3_i32 = arith.constant 3 : i32
    %0 = arith.muli %arg0, %c3_i32 : i32
    %1 = arith.addi %0, %arg1 : i32
    %c4_i32 = arith.constant 4 : i32
    %2 = arith.minsi %1, %c4_i32 : i32
    %c0_i32 = arith.constant 0 : i32
    %c0_i32_0 = arith.constant 0 : i32
    return %2, %c0_i32 : i32, i32
  }
  func.func @transform_1(%arg0: i32, %arg1: i32) -> (i32, i32, i32) {
    %c3_i32 = arith.constant 3 : i32
    %0 = arith.muli %arg0, %c3_i32 : i32
    %1 = arith.addi %0, %arg1 : i32
    %c4_i32 = arith.constant 4 : i32
    %2 = arith.minsi %1, %c4_i32 : i32
    %c0_i32 = arith.constant 0 : i32
    %c0_i32_0 = arith.constant 0 : i32
    %c0_i32_1 = arith.constant 0 : i32
    return %2, %c0_i32, %c0_i32_0 : i32, i32, i32
  }
  func.func @transform_2(%arg0: i32, %arg1: i32) -> (i32, i32, i32) {
    %c0_i32 = arith.constant 0 : i32
    %c0_i32_0 = arith.constant 0 : i32
    %c0_i32_1 = arith.constant 0 : i32
    return %arg0, %c0_i32, %c0_i32_0 : i32, i32, i32
  }
}

</mosaic_0001>

<llo_original>
// kernel: tpu_custom_call.1
$region0: #{tpu_custom_call.1}
  #allocation0 [shape = 'u32[]', space=smem, size = 0x4, offset = 0x4, fixed_abs, tag = 'smem constant byte address 0x4 - core index']
  #allocation1 [shape = 'u32[144,128]{1,0:T(1,128)}', space=vmem, size = 0x12000, scoped, tag = 'internal scratch']
  %s0 = inlined_call_operand.vmem [shape: f32[68,32], index: 0, kind: input, shape index: {}]
  %s1 = inlined_call_operand.vmem [shape: s32[5,1,16], index: 1, kind: input, shape index: {}]
  %s2 = inlined_call_operand.hbm [shape: f32[2,2,32], index: 2, kind: output, shape index: {}]
  %s3 = sld [smem:[#allocation0]]
  $region45: #{tpu_custom_call.1} parent=0
    _
  %s5 = ssub.s32 1, %s3
  %s6 = scalar_select 0, %s5, %s3
  $region1: #{tpu_custom_call.1} parent=0
    #allocation2 [shape = 'u8[2048]{0}', space=vmem, size = 0x800, scoped, tag = 'output window, operand 0']
    #allocation3 [shape = 's32[2]{0}', space=sflag, size = 0x8, scoped, tag = 'scoped memory for tpu_custom_call.1']
    %7 = vsyncpa [#allocation3], 0
    %s8 = scalar_lea.sflag [#allocation3], 1
    %9 = vsyncpa %s8, 0
    loop: start=0, step=1, limit=8
    $region2: #{tpu_custom_call.1} parent=1 // loop_pre_header
      _
    $region3: #{tpu_custom_call.1} parent=1 // loop_header
      %s11 = sphi 0, %s15
      %p12 = scmp.ge.s32.totalorder %s11, 8
      %s18 = sphi 0, %s30
      %s19 = sphi 0, %s26
      %s20 = sphi 0, %s18
      %s21 = sphi 0, %s19
      %s22 = sphi 0, %s20
      %s23 = sphi 0, %s21
      %s41 = sphi 0, %s43
      %s44 = sphi 0, %s41
      %s45 = sphi 0, %s44
      %s61 = sphi 0, %s45
      %s75 = sphi 0, %s77
      %s78 = sphi 0, %s75
      %s79 = sphi 0, %s78
      %s95 = sphi 0, %s79
      %s101 = sphi 0, %s103
      %s104 = sphi 0, %s101
      %s105 = sphi 0, %s104
      %s121 = sphi 0, %s105
    $region4: #{tpu_custom_call.1} parent=1 // loop_header_branch
      %14 = sbr.rel (%p12) target = $region8
    $region5: #{tpu_custom_call.1} parent=1 // loop_body
      %s16 = ssub.s32 %s11, 1
      %s17 = ssub.s32 %s11, 2
      %s24 = sadd.s32 1, %s19
      %p25 = scmp.ge.s32.totalorder %s24, 3
      %s26 = scalar_select %p25, 0, %s24
      %s27 = sadd.s32 1, %s18
      %s28 = scalar_select %p25, %s27, %s18
      %p29 = scmp.ge.s32.totalorder %s28, 2
      %s30 = scalar_select %p29, 0, %s28
      %s31 = smul.u32 %s18, 3
      %s32 = sadd.s32 %s31, %s19
      %p33 = scmp.lt.s32.totalorder %s32, 4
      %s34 = scalar_select %p33, %s32, 4
      %s35 = smul.u32 %s30, 3
      %s36 = sadd.s32 %s35, %s26
      %p37 = scmp.lt.s32.totalorder %s36, 4
      %s38 = scalar_select %p37, %s36, 4
      %s39 = ssub.s32 %s34, %s38
      %p40 = scmp.eq.s32.totalorder %s39, 0
      %s42 = sadd.s32 %s41, 1
      %s43 = scalar_select %p40, %s41, %s42
      %p46 = pneg %p40
      %p47 = scmp.eq.s32.totalorder %s11, 5
      %p48 = por %p46, %p47
      %p49 = scmp.ne.s32.totalorder %s41, %s44
      %p50 = scmp.eq.s32.totalorder %s11, 0
      %p51 = por %p49, %p50
      %p52 = scmp.ne.s32.totalorder %s41, %s44
      %p53 = scmp.eq.s32.totalorder %s16, 5
      %p54 = por %p52, %p53
      %p55 = scmp.ne.s32.totalorder %s44, %s45
      %p56 = scmp.eq.s32.totalorder %s16, 0
      %p57 = por %p55, %p56
      %p58 = scmp.ne.s32.totalorder %s44, %s45
      %p59 = scmp.eq.s32.totalorder %s17, 5
      %p60 = por %p58, %p59
      %p62 = scmp.ne.s32.totalorder %s45, %s61
      %p63 = scmp.eq.s32.totalorder %s17, 0
      %p64 = por %p62, %p63
      %s65 = smul.u32 %s18, 3
      %s66 = sadd.s32 %s65, %s19
      %p67 = scmp.lt.s32.totalorder %s66, 4
      %s68 = scalar_select %p67, %s66, 4
      %s69 = smul.u32 %s30, 3
      %s70 = sadd.s32 %s69, %s26
      %p71 = scmp.lt.s32.totalorder %s70, 4
      %s72 = scalar_select %p71, %s70, 4
      %s73 = ssub.s32 %s68, %s72
      %p74 = scmp.eq.s32.totalorder %s73, 0
      %s76 = sadd.s32 %s75, 1
      %s77 = scalar_select %p74, %s75, %s76
      %p80 = pneg %p74
      %p81 = scmp.eq.s32.totalorder %s11, 5
      %p82 = por %p80, %p81
      %p83 = scmp.ne.s32.totalorder %s75, %s78
      %p84 = scmp.eq.s32.totalorder %s11, 0
      %p85 = por %p83, %p84
      %p86 = scmp.ne.s32.totalorder %s75, %s78
      %p87 = scmp.eq.s32.totalorder %s16, 5
      %p88 = por %p86, %p87
      %p89 = scmp.ne.s32.totalorder %s78, %s79
      %p90 = scmp.eq.s32.totalorder %s16, 0
      %p91 = por %p89, %p90
      %p92 = scmp.ne.s32.totalorder %s78, %s79
      %p93 = scmp.eq.s32.totalorder %s17, 5
      %p94 = por %p92, %p93
      %p96 = scmp.ne.s32.totalorder %s79, %s95
      %p97 = scmp.eq.s32.totalorder %s17, 0
      %p98 = por %p96, %p97
      %s99 = ssub.s32 %s18, %s30
      %p100 = scmp.eq.s32.totalorder %s99, 0
      %s102 = sadd.s32 %s101, 1
      %s103 = scalar_select %p100, %s101, %s102
      %p106 = pneg %p100
      %p107 = scmp.eq.s32.totalorder %s11, 5
      %p108 = por %p106, %p107
      %p109 = scmp.ne.s32.totalorder %s101, %s104
      %p110 = scmp.eq.s32.totalorder %s11, 0
      %p111 = por %p109, %p110
      %p112 = scmp.ne.s32.totalorder %s101, %s104
      %p113 = scmp.eq.s32.totalorder %s16, 5
      %p114 = por %p112, %p113
      %p115 = scmp.ne.s32.totalorder %s104, %s105
      %p116 = scmp.eq.s32.totalorder %s16, 0
      %p117 = por %p115, %p116
      %p118 = scmp.ne.s32.totalorder %s104, %s105
      %p119 = scmp.eq.s32.totalorder %s17, 5
      %p120 = por %p118, %p119
      %p122 = scmp.ne.s32.totalorder %s105, %s121
      %p123 = scmp.eq.s32.totalorder %s17, 0
      %p124 = por %p122, %p123
      %p125 = scmp.le.s32.totalorder 1, %s11
      %p126 = scmp.lt.s32.totalorder %s11, 7
      %p127 = pnand %p125, %p126
      %p128 = pneg %p127
      // Predicated region
      $region9: #{tpu_custom_call.1} parent=5 // pred_check
        _
      $region10: #{tpu_custom_call.1} parent=5 // pred_check_branch
        %130 = sbr.rel (%p127) target = $region12
      $region11: #{tpu_custom_call.1} parent=5 // pred_region
        %s131 = ssub.s32 %s11, 1
      $region12: #{tpu_custom_call.1} parent=5 // pred_fallthru
        _
      %p132 = scmp.lt.s32.totalorder %s11, 6
      // Predicated region
      $region13: #{tpu_custom_call.1} parent=5 // pred_check
        %p133 = pneg %p132
      $region14: #{tpu_custom_call.1} parent=5 // pred_check_branch
        %135 = sbr.rel (%p133) target = $region16
      $region15: #{tpu_custom_call.1} parent=5 // pred_region
        // Predicated region
        $region17: #{tpu_custom_call.1} parent=15 // pred_check
          %p136 = pneg %p51
        $region18: #{tpu_custom_call.1} parent=15 // pred_check_branch
          %138 = sbr.rel (%p136) target = $region20
        $region19: #{tpu_custom_call.1} parent=15 // pred_region
          %s139 = smul.u32 %s18, 3
          %s140 = sadd.s32 %s139, %s19
          %p141 = scmp.lt.s32.totalorder %s140, 4
          %s142 = scalar_select %p141, %s140, 4
          %s143 = smul.u32 2, %s142
          %s144 = ssub.s32 9, %s143
          %p145 = scmp.lt.s32.totalorder %s144, 2
          %s146 = scalar_select %p145, %s144, 2
          %s147 = smul.u32 128, %s146
          %p148 = scmp.lt.s32.totalorder %s143, 8
          %s149 = scalar_select %p148, %s143, 8
          %s150 = smul.addr %s149, 8
          %s151 = scalar_lea.vmem %s0, %s150
          %s152 = smul.u32 %s18, 3
          %s153 = sadd.s32 %s152, %s19
          %p154 = scmp.lt.s32.totalorder %s153, 4
          %s155 = scalar_select %p154, %s153, 4
          %s156 = smul.u32 2, %s155
          %s157 = ssub.s32 9, %s156
          %p158 = scmp.lt.s32.totalorder %s157, 2
          %s159 = scalar_select %p158, %s157, 2
          %s160 = smul.u32 128, %s159
        $region20: #{tpu_custom_call.1} parent=15 // pred_fallthru
          _
        // Predicated region
        $region21: #{tpu_custom_call.1} parent=15 // pred_check
          %p161 = pneg %p85
        $region22: #{tpu_custom_call.1} parent=15 // pred_check_branch
          %163 = sbr.rel (%p161) target = $region24
        $region23: #{tpu_custom_call.1} parent=15 // pred_region
          %s164 = smul.u32 %s18, 3
          %s165 = sadd.s32 %s164, %s19
          %p166 = scmp.lt.s32.totalorder %s165, 4
          %s167 = scalar_select %p166, %s165, 4
          %p168 = scmp.lt.s32.totalorder %s167, 4
          %s169 = scalar_select %p168, %s167, 4
          %s170 = scalar_lea.vmem %s1, %s169
          %s171 = smul.u32 %s18, 3
          %s172 = sadd.s32 %s171, %s19
          %p173 = scmp.lt.s32.totalorder %s172, 4
          %s174 = scalar_select %p173, %s172, 4
        $region24: #{tpu_custom_call.1} parent=15 // pred_fallthru
          _
      $region16: #{tpu_custom_call.1} parent=5 // pred_fallthru
        _
      %p175 = scmp.le.s32.totalorder 1, %s11
      %p176 = scmp.lt.s32.totalorder %s11, 7
      %p177 = pnand %p175, %p176
      %p178 = pneg %p177
      // Predicated region
      $region25: #{tpu_custom_call.1} parent=5 // pred_check
        _
      $region26: #{tpu_custom_call.1} parent=5 // pred_check_branch
        %180 = sbr.rel (%p177) target = $region28
      $region27: #{tpu_custom_call.1} parent=5 // pred_region
        %s181 = ssub.s32 %s11, 1
        %s182 = smul.u32 %s20, 3
        %s183 = sadd.s32 %s182, %s21
        %p184 = scmp.lt.s32.totalorder %s183, 4
        %s185 = scalar_select %p184, %s183, 4
        %s186 = smul.u32 2, %s185
        %s187 = ssub.s32 9, %s186
        %p188 = scmp.lt.s32.totalorder %s187, 2
        %s189 = scalar_select %p188, %s187, 2
        %s190 = smul.u32 128, %s189
        %p191 = scmp.lt.s32.totalorder %s186, 8
        %s192 = scalar_select %p191, %s186, 8
        %s193 = smul.addr %s192, 8
        %s194 = scalar_lea.vmem %s0, %s193
        %p195 = pneg %p57
        %p196 = pneg %p54
        %s197 = smul.u32 %s20, 3
        %s198 = sadd.s32 %s197, %s21
        %p199 = scmp.lt.s32.totalorder %s198, 4
        %s200 = scalar_select %p199, %s198, 4
        %p201 = scmp.lt.s32.totalorder %s200, 4
        %s202 = scalar_select %p201, %s200, 4
        %s203 = scalar_lea.vmem %s1, %s202
        %p204 = pneg %p91
        %p205 = pneg %p88
        %p206 = pneg %p117
        %p207 = pneg %p114
        %s208 = sand.u32 %s104, 1
        %s209 = scalar_lea.sflag [#allocation3], %s208
        %s210 = sand.u32 %s104, 1
        %s211 = smul.addr %s210, 2
        %s212 = scalar_lea.vmem [#allocation2], %s211
        %s213 = smul.u32 %s20, 3
        %s214 = sadd.s32 %s213, %s21
        %p215 = scmp.lt.s32.totalorder %s214, 4
        %s216 = scalar_select %p215, %s214, 4
        %s217 = smul.u32 2, %s216
        %s218 = ssub.s32 9, %s217
        %p219 = scmp.lt.s32.totalorder %s218, 2
        %s220 = scalar_select %p219, %s218, 2
        %s221 = smul.u32 128, %s220
        %p222 = scmp.lt.s32.totalorder %s217, 8
        %s223 = scalar_select %p222, %s217, 8
        %s224 = smul.addr %s223, 8
        %s225 = scalar_lea.vmem %s0, %s224
        %s226 = smul.u32 %s20, 3
        %s227 = sadd.s32 %s226, %s21
        %p228 = scmp.lt.s32.totalorder %s227, 4
        %s229 = scalar_select %p228, %s227, 4
        %s230 = smul.u32 2, %s229
        %s231 = ssub.s32 9, %s230
        %p232 = scmp.lt.s32.totalorder %s231, 2
        %s233 = scalar_select %p232, %s231, 2
        %s234 = smul.u32 128, %s233
        %s235 = smul.u32 %s20, 3
        %s236 = sadd.s32 %s235, %s21
        %p237 = scmp.lt.s32.totalorder %s236, 4
        %s238 = scalar_select %p237, %s236, 4
        %p239 = scmp.lt.s32.totalorder %s238, 4
        %s240 = scalar_select %p239, %s238, 4
        %s241 = scalar_lea.vmem %s1, %s240
        %s242 = smul.u32 %s20, 3
        %s243 = sadd.s32 %s242, %s21
        %p244 = scmp.lt.s32.totalorder %s243, 4
        %s245 = scalar_select %p244, %s243, 4
        %p246 = scmp.eq.s32.totalorder %s21, 0
        // Predicated region
        $region29: #{tpu_custom_call.1} parent=27 // pred_check
          %p247 = pneg %p246
        $region30: #{tpu_custom_call.1} parent=27 // pred_check_branch
          %249 = sbr.rel (%p247) target = $region32
        $region31: #{tpu_custom_call.1} parent=27 // pred_region
          %vm250 = vcmask 254976
          %251 = vst.msk [vmem:[%s212] sm:$0x3] %vm250, 0.0
        $region32: #{tpu_custom_call.1} parent=27 // pred_fallthru
          _
        %s252 = smul.u32 %s20, 3
        %s253 = sadd.s32 %s252, %s21
        %v254 = vld [vmem:[%s225] sm:$0xff]
        %v255 = vld [vmem:[%s225 + $0x8] sm:$0xff]
        %s256 = smul.u32 %s253, 16
        %v257 = vlaneseq
        %v258 = vshrl.u32 %v257, 7
        %v259 = vadd.s32 %v258, 8
        %v260 = vstv %s256
        %v261 = vadd.s32 %v260, %v258
        %v262 = vadd.s32 %v260, %v259
        %vm263 = vcmp.lt.s32.totalorder %v261, 68
        %vm264 = vcmp.lt.s32.totalorder %v262, 68
        %v265 = vsel %vm263, 1, 0
        %v266 = vsel %vm264, 1, 0
        %vm267 = vcmp.eq.s32.totalorder %v265, 1
        %vm268 = vcmp.eq.s32.totalorder %v266, 1
        %v269 = vsel %vm267, %v254, 0.0
        %v270 = vsel %vm268, %v255, 0.0
        %v271 = vld [vmem:[%s241] sm:$0x1]
        %v272 = vlaneseq
        %v273 = vshrl.u32 %v272, 7
        %v274 = vsub.s32 0, %v273
        %v275 = vrot.slane %v271, %v274
        %vm276 = vcmp.eq.s32.totalorder %v275, %v258
        %v277 = vsel %vm276, 1, 0
        %v278 = vcvt.s32.f32 %v277
        %v279 = vld [vmem:[%s212] sm:$0x3]
        %vm280 = vcmask 130048
        %v282 = vsel %vm280, %v278, 0
        %284 = vmatprep.subr.mxu0 0.0
        %285 = vmatpush1.msra.mxu0 0.0
        %286 = vmatprep.subr.mxu0 0.0
        %287 = vmatpush1.msra.mxu0 0.0
        %288 = vmatprep.subr.mxu0 0.0
        %289 = vmatpush1.msra.mxu0 0.0
        %290 = vmatprep.subr.mxu0 0.0
        %291 = vmatpush1.msra.mxu0 0.0
        %292 = vmatprep.subr.mxu0 0.0
        %293 = vmatpush1.msra.mxu0 0.0
        %294 = vmatprep.subr.mxu0 0.0
        %295 = vmatpush1.msra.mxu0 0.0
        %296 = vmatprep.subr.mxu0 0.0
        %297 = vmatpush1.msra.mxu0 0.0
        %298 = vmatprep.subr.mxu0 0.0
        %299 = vmatpush1.msra.mxu0 0.0
        %300 = vmatprep.subr.mxu0 0.0
        %301 = vmatpush1.msra.mxu0 0.0
        %302 = vmatprep.subr.mxu0 0.0
        %303 = vmatpush1.msra.mxu0 0.0
        %304 = vmatprep.subr.mxu0 0.0
        %305 = vmatpush1.msra.mxu0 0.0
        %306 = vmatprep.subr.mxu0 0.0
        %307 = vmatpush1.msra.mxu0 0.0
        %308 = vmatprep.subr.mxu0 0.0
        %309 = vmatpush1.msra.mxu0 0.0
        %310 = vmatprep.subr.mxu0 0.0
        %311 = vmatpush1.msra.mxu0 0.0
        %312 = vmatprep.subr.mxu0 0.0
        %313 = vmatpush1.msra.mxu0 %v270
        %314 = vmatprep.subr.mxu0 0.0
        %315 = vmatpush1.msra.mxu0 %v269
        %316 = vmatprep.subr.mxu0 0.0
        %317 = vmatpush2.msra.mxu0 0.0
        %318 = vmatprep.subr.mxu0 0.0
        %319 = vmatpush2.msra.mxu0 0.0
        %320 = vmatprep.subr.mxu0 0.0
        %321 = vmatpush2.msra.mxu0 0.0
        %322 = vmatprep.subr.mxu0 0.0
        %323 = vmatpush2.msra.mxu0 0.0
        %324 = vmatprep.subr.mxu0 0.0
        %325 = vmatpush2.msra.mxu0 0.0
        %326 = vmatprep.subr.mxu0 0.0
        %327 = vmatpush2.msra.mxu0 0.0
        %328 = vmatprep.subr.mxu0 0.0
        %329 = vmatpush2.msra.mxu0 0.0
        %330 = vmatprep.subr.mxu0 0.0
        %331 = vmatpush2.msra.mxu0 0.0
        %332 = vmatprep.subr.mxu0 0.0
        %333 = vmatpush2.msra.mxu0 0.0
        %334 = vmatprep.subr.mxu0 0.0
        %335 = vmatpush2.msra.mxu0 0.0
        %336 = vmatprep.subr.mxu0 0.0
        %337 = vmatpush2.msra.mxu0 0.0
        %338 = vmatprep.subr.mxu0 0.0
        %339 = vmatpush2.msra.mxu0 0.0
        %340 = vmatprep.subr.mxu0 0.0
        %341 = vmatpush2.msra.mxu0 0.0
        %342 = vmatprep.subr.mxu0 0.0
        %343 = vmatpush2.msra.mxu0 0.0
        %344 = vmatprep.subr.mxu0 0.0
        %345 = vmatpush2.msra.mxu0 0.0
        %346 = vmatprep.subr.mxu0 0.0
        %347 = vmatpush2.msra.mxu0 0.0
        %348 = vmatprep.mubr.f32.mxu0 0.0
        %349 = vmatmul.mubr.f32.gmra.mxu0 %v282
        %v350 = vpop.f32.mrf.mxu0
        %v351 = vadd.f32 0.0, %v350
        %v352 = vpop.f32.mrf.mxu0
        %353 = vdwg.mxu0
        %v354 = vadd.f32 %v279, %v351
        %vm355 = vcmask 254976
        %356 = vst.msk [vmem:[%s212] sm:$0x3] %vm355, %v354
        %s357 = sand.u32 %s104, 1
        %s358 = scalar_lea.sflag [#allocation3], %s357
        %s359 = sand.u32 %s104, 1
        %s360 = smul.addr %s359, 2
        %s361 = scalar_lea.vmem [#allocation2], %s360
        // Predicated region
        $region33: #{tpu_custom_call.1} parent=27 // pred_check
          %p362 = pneg %p114
        $region34: #{tpu_custom_call.1} parent=27 // pred_check_branch
          %364 = sbr.rel (%p362) target = $region36
        $region35: #{tpu_custom_call.1} parent=27 // pred_region
          %s366 = ssub.s32 32, 32
          %367 = vsyncadd %s358, %s366
          %s368 = smul.addr %s20, 32
          %s369 = scalar_lea.hbm %s2, %s368
          %s371 = sshll.u32 %s361, 4
          %s372 = int_to_ptr.vmem [resolvable:$true] %s371
          %374 = dma.vmem_to_hbm [thread:$0]  %s372, 32, %s369, %s358
        $region36: #{tpu_custom_call.1} parent=27 // pred_fallthru
          _
      $region28: #{tpu_custom_call.1} parent=5 // pred_fallthru
        _
      %p375 = scmp.le.s32.totalorder 2, %s11
      // Predicated region
      $region37: #{tpu_custom_call.1} parent=5 // pred_check
        %p376 = pneg %p375
      $region38: #{tpu_custom_call.1} parent=5 // pred_check_branch
        %378 = sbr.rel (%p376) target = $region40
      $region39: #{tpu_custom_call.1} parent=5 // pred_region
        %s379 = ssub.s32 %s11, 2
        // Predicated region
        $region41: #{tpu_custom_call.1} parent=39 // pred_check
          %p380 = pneg %p120
        $region42: #{tpu_custom_call.1} parent=39 // pred_check_branch
          %382 = sbr.rel (%p380) target = $region44
        $region43: #{tpu_custom_call.1} parent=39 // pred_region
          %s383 = sand.u32 %s105, 1
          %s384 = scalar_lea.sflag [#allocation3], %s383
          %s385 = sand.u32 %s105, 1
          %s386 = smul.addr %s385, 2
          %s387 = scalar_lea.vmem [#allocation2], %s386
          %388 = dma.done %s384, 32
        $region44: #{tpu_custom_call.1} parent=39 // pred_fallthru
          _
      $region40: #{tpu_custom_call.1} parent=5 // pred_fallthru
        _
    $region6: #{tpu_custom_call.1} parent=1 // loop_footer
      %s15 = sadd.s32 1, %s11
    $region7: #{tpu_custom_call.1} parent=1 // loop_footer_branch
      %10 = sbr.rel target = $region3
    $region8: #{tpu_custom_call.1} parent=1 // loop_exit
      _
    %389 = vsyncpa [#allocation3], 1
    %s390 = scalar_lea.sflag [#allocation3], 1
    %391 = vsyncpa %s390, 1

</llo_original>
